<compile_context>
chip_gen: v7x
topology: tpu7x:2x2x1
jax: 0.10.0
libtpu: 0.0.40
codegen_flags: <defaults>
</compile_context>

<pallas_src>
import math

import jax
import jax.numpy as jnp
from jax.experimental import pallas as pl
from jax.experimental.pallas import tpu as pltpu


def make_positional_encoding(d_model: int, max_seq_len: int = 1000,
                             dtype=jnp.float32) -> jnp.ndarray:
    """Sinusoidal PE table, identical to the PyTorch __init__.

    Built once in the activation dtype (like the registered buffer) so the
    forward pass does zero per-call slicing / casting work.
    Note: storing pe in bf16 differs slightly from PyTorch's f32 buffer + type
    promotion; acceptable for training, documented here.
    """
    assert d_model % 2 == 0, "sinusoidal positional encoding requires even d_model"
    position = jnp.arange(0, max_seq_len, dtype=jnp.float32)[:, None]            # [L, 1]
    div_term = jnp.exp(
        jnp.arange(0, d_model, 2, dtype=jnp.float32) * (-math.log(10000.0) / d_model)
    )                                                                              # [D/2]
    angles = position * div_term                                                   # [L, D/2]
    pe = jnp.zeros((max_seq_len, d_model), dtype=jnp.float32)
    pe = pe.at[:, 0::2].set(jnp.sin(angles))
    pe = pe.at[:, 1::2].set(jnp.cos(angles))
    return pe.astype(dtype)


# ----------------------------------------------------------------------------- kernel
def _add_pe_kernel(x_ref, pe_ref, o_ref):
    # Same body for every path:
    #   3-D path:       x_ref/o_ref (tS, D)   + pe_ref (tS, D)
    #   flattened path: x_ref/o_ref (tB, tC)  + pe_ref (1, tC)  (broadcast over rows)
    o_ref[...] = x_ref[...] + pe_ref[...]


def _round_up(n: int, m: int) -> int:
    return -(-n // m) * m


# ----------------------------------------------------------------------------- wrapper
def positional_encoding_forward(x: jnp.ndarray, pe: jnp.ndarray,
                                *, target_block_bytes: int = 2 << 20) -> jnp.ndarray:
    """x: [B, S, D]; pe: full [max_seq_len, D] table (activation dtype). Returns x + pe[:S]."""
    B, S, D = x.shape
    L = pe.shape[0]
    assert pe.shape[1] == D, f"pe d_model {pe.shape[1]} != x d_model {D}"
    assert S <= L, f"seq_len {S} exceeds max_seq_len {L}"
    if pe.dtype != x.dtype:
        # Fallback only: prefer building the table in the activation dtype once at
        # construction (make_positional_encoding(dtype=...)) so this never runs.
        pe = pe.astype(x.dtype)

    dsize = x.dtype.itemsize
    sub = max(8, 32 // dsize)          # sublane rounding: 8 f32, 16 bf16, 32 int8/fp8

    cost = pl.CostEstimate(
        flops=B * S * D,
        transcendentals=0,
        bytes_accessed=(2 * B * S * D + S * D) * dsize,
    )

    row_bytes = S * D * dsize          # one batch element's (S, D) slab

    # ---------------------------------------------------------------- 3-D path
    # Lane-aligned D and a per-batch slab larger than the block budget:
    # tile the sequence dimension, batch innermost so pe is never re-fetched.
    if D % 128 == 0 and row_bytes > target_block_bytes:
        tS = max(sub, (target_block_bytes // (D * dsize)) // sub * sub)
        tS = min(tS, _round_up(S, sub))
        grid = (pl.cdiv(S, tS), B)     # batch innermost -> pe block index constant
        return pl.pallas_call(
            _add_pe_kernel,
            out_shape=jax.ShapeDtypeStruct((B, S, D), x.dtype),
            grid_spec=pltpu.PrefetchScalarGridSpec(
                num_scalar_prefetch=0,
                grid=grid,
                in_specs=[
                    # None squeezes the size-1 batch dim out of the kernel Ref.
                    pl.BlockSpec((None, tS, D), lambda s, b: (b, s, 0)),
                    # Full pe table passed in; index_map only ever touches rows < S.
                    pl.BlockSpec((tS, D), lambda s, b: (s, 0)),
                ],
                out_specs=pl.BlockSpec((None, tS, D), lambda s, b: (b, s, 0)),
            ),
            compiler_params=pltpu.CompilerParams(
                dimension_semantics=("parallel", "parallel"),
            ),
            cost_estimate=cost,
        )(x, pe)

    # ---------------------------------------------------------------- flattened paths
    # Flatten (S, D) -> S*D so the minor dim is lane-dense (multiple of 128);
    # the batch broadcast is preserved since pe flattens identically along S*D.
    C = S * D
    x2 = x.reshape(B, C)                       # contiguous row-major reshape: free
    pe_flat = pe.reshape(1, L * D)             # full table, flattened: free

    if row_bytes <= target_block_bytes:
        # Whole rows fit the budget: (tB, C) blocks are single stride-free DMAs and
        # the pe block index is (0, 0) for the entire grid -> pe DMA'd exactly once.
        tC = C if C % 128 == 0 else _round_up(C, 128)   # lane-dense minor dim
        rows_per_block = max(1, target_block_bytes // (tC * dsize))
        if rows_per_block >= B or B <= sub:
            tB = B                                       # full dim (always legal)
        else:
            tB = max(sub, (rows_per_block // sub) * sub)
        grid = (pl.cdiv(B, tB),)
        in_specs = [
            pl.BlockSpec((tB, tC), lambda b: (b, 0)),
            pl.BlockSpec((1, tC), lambda b: (0, 0)),
        ]
        out_spec = pl.BlockSpec((tB, tC), lambda b: (b, 0))
        dims = ("parallel",)
    else:
        # Lane-sparse D with rows bigger than the budget: split columns too,
        # batch innermost so the pe column block is reused across batch steps.
        tB = B if B <= sub else sub
        tC = (target_block_bytes // (tB * dsize)) // 128 * 128
        tC = int(min(max(128, tC), _round_up(C, 128)))
        grid = (pl.cdiv(C, tC), pl.cdiv(B, tB))
        in_specs = [
            pl.BlockSpec((tB, tC), lambda c, b: (b, c)),
            pl.BlockSpec((1, tC), lambda c, b: (0, c)),
        ]
        out_spec = pl.BlockSpec((tB, tC), lambda c, b: (b, c))
        dims = ("parallel", "parallel")

    out2 = pl.pallas_call(
        _add_pe_kernel,
        out_shape=jax.ShapeDtypeStruct((B, C), x.dtype),
        grid_spec=pltpu.PrefetchScalarGridSpec(
            num_scalar_prefetch=0,
            grid=grid,
            in_specs=in_specs,
            out_specs=out_spec,
        ),
        compiler_params=pltpu.CompilerParams(dimension_semantics=dims),
        cost_estimate=cost,
    )(x2, pe_flat)
    return out2.reshape(B, S, D)


if __name__ == "__main__":
    max_seq_len = 1000
    key = jax.random.PRNGKey(0)
    k1, k2, k3, k4, k5 = jax.random.split(key, 5)

    # Case 1: module-like small shape, f32 (flattened full-row path, D=32).
    B, S, D = 2, 8, 32
    x = jax.random.normal(k1, (B, S, D), dtype=jnp.float32)
    pe = make_positional_encoding(D, max_seq_len, dtype=jnp.float32)
    out = jax.block_until_ready(positional_encoding_forward(x, pe))
    ref = x + pe[:S, :][None, :, :]
    assert out.shape == (B, S, D)
    assert jnp.allclose(out, ref, atol=1e-6, rtol=1e-6)

    # Case 2: lane-aligned D but tiny per-batch slab -> still the flattened path.
    B2, S2, D2 = 2, 16, 128
    x2 = jax.random.normal(k2, (B2, S2, D2), dtype=jnp.float32)
    pe2 = make_positional_encoding(D2, max_seq_len, dtype=jnp.float32)
    out2 = jax.block_until_ready(positional_encoding_forward(x2, pe2))
    ref2 = x2 + pe2[:S2, :][None, :, :]
    assert jnp.allclose(out2, ref2, atol=1e-6, rtol=1e-6)

    # Case 3: bf16 activations with the pe table built in bf16 at construction
    # (no per-call cast pass; documented divergence from strict f32 promotion).
    B3, S3, D3 = 4, 8, 32
    x3 = jax.random.normal(k3, (B3, S3, D3), dtype=jnp.bfloat16)
    pe3 = make_positional_encoding(D3, max_seq_len, dtype=jnp.bfloat16)
    out3 = jax.block_until_ready(positional_encoding_forward(x3, pe3))
    ref3 = x3 + pe3[:S3, :][None, :, :]
    assert jnp.allclose(out3.astype(jnp.float32), ref3.astype(jnp.float32),
                        atol=1e-2, rtol=1e-2)

    # Case 4: exercise the 3-D sequence-tiled path on small data by shrinking the
    # block budget (in production this path is taken for multi-MiB slabs).
    B4, S4, D4 = 2, 64, 128
    x4 = jax.random.normal(k4, (B4, S4, D4), dtype=jnp.float32)
    pe4 = make_positional_encoding(D4, max_seq_len, dtype=jnp.float32)
    out4 = jax.block_until_ready(
        positional_encoding_forward(x4, pe4, target_block_bytes=4096))
    ref4 = x4 + pe4[:S4, :][None, :, :]
    assert jnp.allclose(out4, ref4, atol=1e-6, rtol=1e-6)

    # Case 5: exercise the column-split flattened path (lane-sparse D, huge rows).
    B5, S5, D5 = 2, 64, 32
    x5 = jax.random.normal(k5, (B5, S5, D5), dtype=jnp.float32)
    pe5 = make_positional_encoding(D5, max_seq_len, dtype=jnp.float32)
    out5 = jax.block_until_ready(
        positional_encoding_forward(x5, pe5, target_block_bytes=4096))
    ref5 = x5 + pe5[:S5, :][None, :, :]
    assert jnp.allclose(out5, ref5, atol=1e-6, rtol=1e-6)

    print("KERNEL_OK")
</pallas_src>

<mosaic_0001>
module attributes {stable_mosaic.version = 11 : i64} {
  func.func @_add_pe_kernel(%arg0: i32, %arg1: memref<2x256xf32, #tpu.memory_space<vmem>>, %arg2: memref<1x256xf32, #tpu.memory_space<vmem>>, %arg3: memref<2x256xf32, #tpu.memory_space<vmem>>) attributes {dimension_semantics = [#tpu.dimension_semantics<parallel>], iteration_bounds = array<i64: 1>, scalar_prefetch = 0 : i64, scratch_operands = 0 : i64, tpu.core_type = #tpu.core_type<tc>, window_params = [{transform_indices = @transform_0, window_bounds = array<i64: 2, 256>}, {transform_indices = @transform_1, window_bounds = array<i64: 1, 256>}, {transform_indices = @transform_2, window_bounds = array<i64: 2, 256>}]} {
    %c0 = arith.constant 0 : index
    %c0_0 = arith.constant 0 : index
    %0 = vector.load %arg1[%c0, %c0_0] : memref<2x256xf32, #tpu.memory_space<vmem>>, vector<2x256xf32>
    %c0_1 = arith.constant 0 : index
    %c0_2 = arith.constant 0 : index
    %1 = vector.load %arg2[%c0_1, %c0_2] : memref<1x256xf32, #tpu.memory_space<vmem>>, vector<1x256xf32>
    %2 = vector.broadcast %1 : vector<1x256xf32> to vector<2x256xf32>
    %3 = arith.addf %0, %2 : vector<2x256xf32>
    %c0_3 = arith.constant 0 : index
    %c0_4 = arith.constant 0 : index
    %4 = vector.load %arg3[%c0_3, %c0_4] : memref<2x256xf32, #tpu.memory_space<vmem>>, vector<2x256xf32>
    tpu.vector_store %arg3[%c0_3, %c0_4], %3 {strides = array<i32>} : memref<2x256xf32, #tpu.memory_space<vmem>>, vector<2x256xf32>,
    return
  }
  func.func @transform_0(%arg0: i32) -> (i32, i32) {
    %c0_i32 = arith.constant 0 : i32
    %c0_i32_0 = arith.constant 0 : i32
    return %arg0, %c0_i32 : i32, i32
  }
  func.func @transform_1(%arg0: i32) -> (i32, i32) {
    %c0_i32 = arith.constant 0 : i32
    %c0_i32_0 = arith.constant 0 : i32
    %c0_i32_1 = arith.constant 0 : i32
    return %c0_i32, %c0_i32_0 : i32, i32
  }
  func.func @transform_2(%arg0: i32) -> (i32, i32) {
    %c0_i32 = arith.constant 0 : i32
    %c0_i32_0 = arith.constant 0 : i32
    return %arg0, %c0_i32 : i32, i32
  }
}

</mosaic_0001>

<llo_original>
// kernel: tpu_custom_call.1
$region0: #{tpu_custom_call.1}
  #allocation0 [shape = 'u32[]', space=smem, size = 0x4, offset = 0x4, fixed_abs, tag = 'smem constant byte address 0x4 - core index']
  #allocation1 [shape = 'u32[144,128]{1,0:T(1,128)}', space=vmem, size = 0x12000, scoped, tag = 'internal scratch']
  %s0 = inlined_call_operand.hbm [shape: f32[2,256], index: 0, kind: input, shape index: {}]
  %s1 = inlined_call_operand.hbm [shape: f32[1,32000], index: 1, kind: input, shape index: {}]
  %s2 = inlined_call_operand.hbm [shape: f32[2,256], index: 2, kind: output, shape index: {}]
  %s3 = sld [smem:[#allocation0]]
  $region26: #{tpu_custom_call.1} parent=0
    _
  %s5 = ssub.s32 1, %s3
  %s6 = scalar_select 0, %s5, %s3
  $region1: #{tpu_custom_call.1} parent=0
    #allocation2 [shape = 'u8[2048]{0}', space=vmem, size = 0x800, scoped, tag = 'input window, operand 0, single buffered']
    #allocation3 [shape = 's32[1]{0}', space=sflag, size = 0x4, scoped, tag = 'scoped memory for tpu_custom_call.1']
    #allocation4 [shape = 's32[1]{0}', space=sflag, size = 0x4, scoped, tag = 'scoped memory for tpu_custom_call.1']
    #allocation5 [shape = 'u8[1024]{0}', space=vmem, size = 0x400, scoped, tag = 'input window, operand 1, single buffered']
    #allocation6 [shape = 's32[1]{0}', space=sflag, size = 0x4, scoped, tag = 'scoped memory for tpu_custom_call.1']
    #allocation7 [shape = 'u8[2048]{0}', space=vmem, size = 0x800, scoped, tag = 'output window, operand 0, single buffered']
    %7 = vsyncpa [#allocation3], 0
    %8 = vsyncpa [#allocation6], 0
    %9 = vsyncpa [#allocation4], 0
    // Predicated region
    $region2: #{tpu_custom_call.1} parent=1 // pred_check
      _
    $region3: #{tpu_custom_call.1} parent=1 // pred_check_branch
      %11 = sbr.rel (0) target = $region5
    $region4: #{tpu_custom_call.1} parent=1 // pred_region
      %s13 = ssub.s32 64, 64
      %14 = vsyncadd [#allocation3], %s13
      %s16 = sshll.u32 [#allocation2], 4
      %s17 = int_to_ptr.vmem [resolvable:$true] %s16
      %19 = dma.hbm_to_vmem [thread:$0]  %s0, 64, %s17, [#allocation3]
    $region5: #{tpu_custom_call.1} parent=1 // pred_fallthru
      _
    // Predicated region
    $region6: #{tpu_custom_call.1} parent=1 // pred_check
      _
    $region7: #{tpu_custom_call.1} parent=1 // pred_check_branch
      %21 = sbr.rel (0) target = $region9
    $region8: #{tpu_custom_call.1} parent=1 // pred_region
      %s23 = ssub.s32 32, 32
      %24 = vsyncadd [#allocation6], %s23
      %s26 = sshll.u32 [#allocation5], 4
      %s27 = int_to_ptr.vmem [resolvable:$true] %s26
      %29 = dma.hbm_to_vmem [thread:$0]  %s1, 32, %s27, [#allocation6]
    $region9: #{tpu_custom_call.1} parent=1 // pred_fallthru
      _
    // Predicated region
    $region10: #{tpu_custom_call.1} parent=1 // pred_check
      _
    $region11: #{tpu_custom_call.1} parent=1 // pred_check_branch
      %31 = sbr.rel (0) target = $region13
    $region12: #{tpu_custom_call.1} parent=1 // pred_region
      %32 = dma.done [#allocation3], 64
    $region13: #{tpu_custom_call.1} parent=1 // pred_fallthru
      _
    // Predicated region
    $region14: #{tpu_custom_call.1} parent=1 // pred_check
      _
    $region15: #{tpu_custom_call.1} parent=1 // pred_check_branch
      %34 = sbr.rel (0) target = $region17
    $region16: #{tpu_custom_call.1} parent=1 // pred_region
      %35 = dma.done [#allocation6], 32
    $region17: #{tpu_custom_call.1} parent=1 // pred_fallthru
      _
    %v36 = vld [vmem:[#allocation2] sm:$0xf]
    %v37 = vld [vmem:[#allocation5] sm:$0x3]
    %v39 = vlaneseq
    %v40 = vshrl.u32 %v39, 7
    %v41 = vsub.s32 0, %v40
    %v42 = vrot.slane %v37, %v41
    %v43 = vlaneseq
    %v44 = vshrl.u32 %v43, 7
    %v45 = vsub.s32 1, %v44
    %v46 = vrot.slane %v37, %v45
    %v47 = vcombine.low %v42, %v46
    %v49 = vunpack.c.l.s4 1983009808
    %v50 = vunpack.c.0.s8 %v49
    %v51 = vlaneseq
    %v52 = vshrl.u32 %v51, 7
    %v53 = vsub.s32 %v50, %v52
    %v54 = vrot.slane %v47, %v53
    %v56 = vadd.f32 %v36, %v54
    %57 = vst [vmem:[#allocation7] sm:$0xf] %v56
    // Predicated region
    $region18: #{tpu_custom_call.1} parent=1 // pred_check
      _
    $region19: #{tpu_custom_call.1} parent=1 // pred_check_branch
      %59 = sbr.rel (0) target = $region21
    $region20: #{tpu_custom_call.1} parent=1 // pred_region
      %s61 = ssub.s32 64, 64
      %62 = vsyncadd [#allocation4], %s61
      %s64 = sshll.u32 [#allocation7], 4
      %s65 = int_to_ptr.vmem [resolvable:$true] %s64
      %67 = dma.vmem_to_hbm [thread:$0]  %s65, 64, %s2, [#allocation4]
    $region21: #{tpu_custom_call.1} parent=1 // pred_fallthru
      _
    // Predicated region
    $region22: #{tpu_custom_call.1} parent=1 // pred_check
      _
    $region23: #{tpu_custom_call.1} parent=1 // pred_check_branch
      %69 = sbr.rel (0) target = $region25
    $region24: #{tpu_custom_call.1} parent=1 // pred_region
      %70 = dma.done [#allocation4], 64
    $region25: #{tpu_custom_call.1} parent=1 // pred_fallthru
      _
    %71 = vsyncpa [#allocation3], 1
    %72 = vsyncpa [#allocation6], 1
    %73 = vsyncpa [#allocation4], 1

</llo_original>
